<compile_context>
chip_gen: v6e
topology: v6e:2x2x1
jax: 0.10.0
libtpu: 0.0.40
codegen_flags: <defaults>
</compile_context>

<pallas_src>
import jax
import jax.numpy as jnp
from jax.experimental import pallas as pl
from jax.experimental.pallas import tpu as pltpu


# Hard-concrete (L0) hyper-parameters from the PyTorch module.
_EPS = 1e-20
_GAMMA = -0.1
_ZETA = 1.1
_BETA = 0.66


def _round_up(n, m):
    return ((n + m - 1) // m) * m


def _pad2d(a, rows, cols):
    return jnp.pad(a, ((0, rows - a.shape[0]), (0, cols - a.shape[1])))


def _choose_batch_tiling(batch, tile_b):
    """Pad batch to a 16-row quantum (bf16 sublanes) and pick TILE_B as a divisor of it."""
    b_pad = _round_up(max(batch, 16), 16)
    units = b_pad // 16
    max_units = max(1, min(tile_b, b_pad) // 16)
    divisors = [d for d in range(1, max_units + 1) if units % d == 0]
    tile_units = max(divisors)
    # Prefer >=2 batch tiles (lets the "parallel" grid axis shard across v7x's two
    # TensorCores) as long as tiles stay reasonably large (>=128 rows).
    smaller = [d for d in divisors if d < units and d * 16 >= 128]
    if tile_units == units and smaller:
        tile_units = max(smaller)
    return b_pad, tile_units * 16


def _mlp_kernel(x_ref, w1_ref, b1_ref, w2_ref, b2_ref, w3_ref, b3_ref, o_ref):
    """One TILE_B batch tile of the 3-layer MLP.

    x_ref:  (TILE_B, D_pad)   bf16, streamed per grid step
    w*_ref: (in_pad, out_pad) bf16, VMEM-resident
    b*_ref: (1, out_pad)      f32,  VMEM-resident
    o_ref:  (TILE_B, C_pad)   bf16, lane-dense
    """
    h = jnp.dot(x_ref[...], w1_ref[...], preferred_element_type=jnp.float32)
    h = jnp.maximum(h + b1_ref[...], 0.0).astype(jnp.bfloat16)

    h = jnp.dot(h, w2_ref[...], preferred_element_type=jnp.float32)
    h = jnp.maximum(h + b2_ref[...], 0.0).astype(jnp.bfloat16)

    o_ref[...] = (jnp.dot(h, w3_ref[...], preferred_element_type=jnp.float32)
                  + b3_ref[...]).astype(o_ref.dtype)


def _pallas_mlp(x, mask_feat, params, *, tile_b=2048):
    """out = relu(relu((x*mask) @ W1 + b1) @ W2 + b2) @ W3 + b3 via one pallas_call."""
    B, D = x.shape
    H1 = params["w1"].shape[1]
    H2 = params["w2"].shape[1]
    C = params["w3"].shape[1]

    # Padded dims: smallest 128-multiples on the lane/N axes (300 -> 384, 100 -> 128,
    # classes -> 128 keeps the output store lane-dense).  The feature dim is only padded
    # to a multiple of 16 (bf16 sublane packing): block last dim == full array dim, so
    # the (8,128) rule is still satisfied and x's HBM read stays narrow.
    D_pad = _round_up(D, 16)
    H1_pad = _round_up(H1, 128)
    H2_pad = _round_up(H2, 128)
    C_pad = _round_up(C, 128)

    B_pad, TILE_B = _choose_batch_tiling(B, tile_b)

    # Fold the per-feature L0 gate into W1's rows (exact: (x*m)@W1 == x@(m[:,None]*W1)),
    # zero-pad everything (exact: padded b entries are 0, padded W rows/cols are 0),
    # cast matmul operands to bf16.  x is cast to bf16 BEFORE padding (single narrow pass).
    w1 = _pad2d(mask_feat[:, None] * params["w1"], D_pad, H1_pad).astype(jnp.bfloat16)
    w2 = _pad2d(params["w2"], H1_pad, H2_pad).astype(jnp.bfloat16)
    w3 = _pad2d(params["w3"], H2_pad, C_pad).astype(jnp.bfloat16)
    b1 = _pad2d(params["b1"].reshape(1, -1), 1, H1_pad).astype(jnp.float32)
    b2 = _pad2d(params["b2"].reshape(1, -1), 1, H2_pad).astype(jnp.float32)
    b3 = _pad2d(params["b3"].reshape(1, -1), 1, C_pad).astype(jnp.float32)
    x_p = _pad2d(x.astype(jnp.bfloat16), B_pad, D_pad)

    grid = (B_pad // TILE_B,)

    def resident(shape):
        return pl.BlockSpec(shape, lambda i: (0, 0))

    flops = 2 * B_pad * (D_pad * H1_pad + H1_pad * H2_pad + H2_pad * C_pad)
    bytes_accessed = (x_p.size * 2
                      + (w1.size + w2.size + w3.size) * 2
                      + (b1.size + b2.size + b3.size) * 4
                      + B_pad * C_pad * 2)  # bf16 output writeback

    out = pl.pallas_call(
        _mlp_kernel,
        out_shape=jax.ShapeDtypeStruct((B_pad, C_pad), jnp.bfloat16),
        grid=grid,
        in_specs=[
            pl.BlockSpec((TILE_B, D_pad), lambda i: (i, 0)),    # x: streamed per tile
            resident((D_pad, H1_pad)), resident((1, H1_pad)),   # W1 / b1 (resident)
            resident((H1_pad, H2_pad)), resident((1, H2_pad)),  # W2 / b2 (resident)
            resident((H2_pad, C_pad)), resident((1, C_pad)),    # W3 / b3 (resident)
        ],
        out_specs=pl.BlockSpec((TILE_B, C_pad), lambda i: (i, 0)),
        compiler_params=pltpu.CompilerParams(
            dimension_semantics=("parallel",),        # shard batch tiles across TCs on v7x
            vmem_limit_bytes=32 * 1024 * 1024),       # headroom on v5e (default 16 MiB)
        cost_estimate=pl.CostEstimate(flops=flops, transcendentals=0,
                                      bytes_accessed=bytes_accessed),
    )(x_p, w1, b1, w2, b2, w3, b3)

    # Only the real rows/classes matter; cast the tiny sliced result back to f32.
    return out[:B, :C].astype(jnp.float32)


def _l0_train_mask(loga, key):
    """Hard-concrete gate sample; matches MLP_lasso_l0.l0_train exactly
    (including the `+ eps` added to loga inside the sigmoid argument)."""
    u = jax.random.uniform(key, loga.shape, dtype=jnp.float32)
    s = jax.nn.sigmoid((jnp.log(u + _EPS) - jnp.log(1.0 - u + _EPS) + loga + _EPS) / _BETA)
    s_bar = s * (_ZETA - _GAMMA) + _GAMMA
    return jnp.clip(s_bar, 0.0, 1.0)


def mlp_lasso_l0_forward(x, loga, group_idx, params, *, key, tile_b=2048):
    """Pallas implementation of MLP_lasso_l0.forward (training-mode stochastic gates)."""
    mask_z = _l0_train_mask(loga, key)     # (group_num,)
    mask_feat = mask_z[group_idx]          # per-feature gate, (input_dim,)
    return _pallas_mlp(x, mask_feat, params, tile_b=tile_b)


def _init_params(key, input_dim, layer_dims, num_classes):
    """Deterministic synthetic init (PyTorch Linear-style uniform fan-in); weights [in, out]."""
    dims = [input_dim] + list(layer_dims) + [num_classes]
    params = {}
    keys = jax.random.split(key, 2 * (len(dims) - 1))
    for i in range(len(dims) - 1):
        fan_in, fan_out = dims[i], dims[i + 1]
        bound = 1.0 / jnp.sqrt(jnp.float32(fan_in))
        params[f"w{i + 1}"] = jax.random.uniform(
            keys[2 * i], (fan_in, fan_out), minval=-bound, maxval=bound, dtype=jnp.float32)
        params[f"b{i + 1}"] = jax.random.uniform(
            keys[2 * i + 1], (fan_out,), minval=-bound, maxval=bound, dtype=jnp.float32)
    return params


def _reference_forward(x, mask_feat, params):
    h = x * mask_feat
    h = jnp.maximum(h @ params["w1"] + params["b1"], 0.0)
    h = jnp.maximum(h @ params["w2"] + params["b2"], 0.0)
    return h @ params["w3"] + params["b3"]


if __name__ == "__main__":
    # Small shapes consistent with the module's forward.
    batch = 16
    input_dim = 32
    layer_dims = (300, 100)   # module defaults
    num_classes = 5
    group_num = 8             # number of L0 gate groups

    key = jax.random.PRNGKey(0)
    k_x, k_g, k_a, k_u, k_p = jax.random.split(key, 5)

    x = jax.random.normal(k_x, (batch, input_dim), dtype=jnp.float32)
    # TODO(synk): original module loads group_idx from ./data/group_idx_*.npy; synthesized here.
    group_idx = jax.random.randint(k_g, (input_dim,), 0, group_num)
    loga = jax.random.normal(k_a, (group_num,), dtype=jnp.float32)
    params = _init_params(k_p, input_dim, layer_dims, num_classes)

    out = mlp_lasso_l0_forward(x, loga, group_idx, params, key=k_u)
    out = jax.block_until_ready(out)
    assert out.shape == (batch, num_classes)

    # Reference (pure-JAX f32) using the same deterministic gate sample.
    mask_feat = _l0_train_mask(loga, k_u)[group_idx]
    ref = _reference_forward(x, mask_feat, params)
    max_err = float(jnp.max(jnp.abs(out - ref)))
    assert jnp.allclose(out, ref, atol=5e-2, rtol=5e-2), f"mismatch vs reference: {max_err}"

    print("KERNEL_OK")
</pallas_src>

<mosaic_0001>
module attributes {stable_mosaic.version = 11 : i64} {
  func.func @_mlp_kernel(%arg0: i32, %arg1: memref<16x32xbf16, #tpu.memory_space<vmem>>, %arg2: memref<32x384xbf16, #tpu.memory_space<vmem>>, %arg3: memref<1x384xf32, #tpu.memory_space<vmem>>, %arg4: memref<384x128xbf16, #tpu.memory_space<vmem>>, %arg5: memref<1x128xf32, #tpu.memory_space<vmem>>, %arg6: memref<128x128xbf16, #tpu.memory_space<vmem>>, %arg7: memref<1x128xf32, #tpu.memory_space<vmem>>, %arg8: memref<16x128xbf16, #tpu.memory_space<vmem>>) attributes {dimension_semantics = [#tpu.dimension_semantics<parallel>], iteration_bounds = array<i64: 1>, scalar_prefetch = 0 : i64, scratch_operands = 0 : i64, tpu.core_type = #tpu.core_type<tc>, window_params = [{transform_indices = @transform_0, window_bounds = array<i64: 16, 32>}, {pipeline_mode = #tpu.pipeline_mode<synchronous>, transform_indices = @transform_1, window_bounds = array<i64: 32, 384>}, {pipeline_mode = #tpu.pipeline_mode<synchronous>, transform_indices = @transform_2, window_bounds = array<i64: 1, 384>}, {pipeline_mode = #tpu.pipeline_mode<synchronous>, transform_indices = @transform_3, window_bounds = array<i64: 384, 128>}, {pipeline_mode = #tpu.pipeline_mode<synchronous>, transform_indices = @transform_4, window_bounds = array<i64: 1, 128>}, {pipeline_mode = #tpu.pipeline_mode<synchronous>, transform_indices = @transform_5, window_bounds = array<i64: 128, 128>}, {pipeline_mode = #tpu.pipeline_mode<synchronous>, transform_indices = @transform_6, window_bounds = array<i64: 1, 128>}, {transform_indices = @transform_7, window_bounds = array<i64: 16, 128>}]} {
    %c0 = arith.constant 0 : index
    %c0_0 = arith.constant 0 : index
    %0 = vector.load %arg1[%c0, %c0_0] : memref<16x32xbf16, #tpu.memory_space<vmem>>, vector<16x32xbf16>
    %c0_1 = arith.constant 0 : index
    %c0_2 = arith.constant 0 : index
    %1 = vector.load %arg2[%c0_1, %c0_2] : memref<32x384xbf16, #tpu.memory_space<vmem>>, vector<32x384xbf16>
    %cst = arith.constant dense<0.000000e+00> : vector<16x384xf32>
    %2 = tpu.matmul %0, %1, %cst {dimension_numbers = #tpu.dot_dimension_numbers<[1], [0], [0], [1], [0, 0, 1, 1], [], []>} : vector<16x32xbf16>, vector<32x384xbf16>, vector<16x384xf32> -> vector<16x384xf32>
    %c0_3 = arith.constant 0 : index
    %c0_4 = arith.constant 0 : index
    %3 = vector.load %arg3[%c0_3, %c0_4] : memref<1x384xf32, #tpu.memory_space<vmem>>, vector<1x384xf32>
    %4 = vector.broadcast %3 : vector<1x384xf32> to vector<16x384xf32>
    %5 = arith.addf %2, %4 : vector<16x384xf32>
    %cst_5 = arith.constant 0.000000e+00 : f32
    %6 = vector.broadcast %cst_5 : f32 to vector<16x384xf32>
    %7 = arith.maximumf %5, %6 : vector<16x384xf32>
    %8 = arith.truncf %7 : vector<16x384xf32> to vector<16x384xbf16>
    %c0_6 = arith.constant 0 : index
    %c0_7 = arith.constant 0 : index
    %9 = vector.load %arg4[%c0_6, %c0_7] : memref<384x128xbf16, #tpu.memory_space<vmem>>, vector<384x128xbf16>
    %cst_8 = arith.constant dense<0.000000e+00> : vector<16x128xf32>
    %10 = tpu.matmul %8, %9, %cst_8 {dimension_numbers = #tpu.dot_dimension_numbers<[1], [0], [0], [1], [0, 0, 1, 1], [], []>} : vector<16x384xbf16>, vector<384x128xbf16>, vector<16x128xf32> -> vector<16x128xf32>
    %c0_9 = arith.constant 0 : index
    %c0_10 = arith.constant 0 : index
    %11 = vector.load %arg5[%c0_9, %c0_10] : memref<1x128xf32, #tpu.memory_space<vmem>>, vector<1x128xf32>
    %12 = vector.broadcast %11 : vector<1x128xf32> to vector<16x128xf32>
    %13 = arith.addf %10, %12 : vector<16x128xf32>
    %cst_11 = arith.constant 0.000000e+00 : f32
    %14 = vector.broadcast %cst_11 : f32 to vector<16x128xf32>
    %15 = arith.maximumf %13, %14 : vector<16x128xf32>
    %16 = arith.truncf %15 : vector<16x128xf32> to vector<16x128xbf16>
    %c0_12 = arith.constant 0 : index
    %c0_13 = arith.constant 0 : index
    %17 = vector.load %arg6[%c0_12, %c0_13] : memref<128x128xbf16, #tpu.memory_space<vmem>>, vector<128x128xbf16>
    %cst_14 = arith.constant dense<0.000000e+00> : vector<16x128xf32>
    %18 = tpu.matmul %16, %17, %cst_14 {dimension_numbers = #tpu.dot_dimension_numbers<[1], [0], [0], [1], [0, 0, 1, 1], [], []>} : vector<16x128xbf16>, vector<128x128xbf16>, vector<16x128xf32> -> vector<16x128xf32>
    %c0_15 = arith.constant 0 : index
    %c0_16 = arith.constant 0 : index
    %19 = vector.load %arg7[%c0_15, %c0_16] : memref<1x128xf32, #tpu.memory_space<vmem>>, vector<1x128xf32>
    %20 = vector.broadcast %19 : vector<1x128xf32> to vector<16x128xf32>
    %21 = arith.addf %18, %20 : vector<16x128xf32>
    %22 = arith.truncf %21 : vector<16x128xf32> to vector<16x128xbf16>
    %c0_17 = arith.constant 0 : index
    %c0_18 = arith.constant 0 : index
    %23 = vector.load %arg8[%c0_17, %c0_18] : memref<16x128xbf16, #tpu.memory_space<vmem>>, vector<16x128xbf16>
    tpu.vector_store %arg8[%c0_17, %c0_18], %22 {strides = array<i32>} : memref<16x128xbf16, #tpu.memory_space<vmem>>, vector<16x128xbf16>,
    return
  }
  func.func @transform_0(%arg0: i32) -> (i32, i32) {
    %c0_i32 = arith.constant 0 : i32
    %c0_i32_0 = arith.constant 0 : i32
    return %arg0, %c0_i32 : i32, i32
  }
  func.func @transform_1(%arg0: i32) -> (i32, i32) {
    %c0_i32 = arith.constant 0 : i32
    %c0_i32_0 = arith.constant 0 : i32
    %c0_i32_1 = arith.constant 0 : i32
    return %c0_i32, %c0_i32_0 : i32, i32
  }
  func.func @transform_2(%arg0: i32) -> (i32, i32) {
    %c0_i32 = arith.constant 0 : i32
    %c0_i32_0 = arith.constant 0 : i32
    %c0_i32_1 = arith.constant 0 : i32
    return %c0_i32, %c0_i32_0 : i32, i32
  }
  func.func @transform_3(%arg0: i32) -> (i32, i32) {
    %c0_i32 = arith.constant 0 : i32
    %c0_i32_0 = arith.constant 0 : i32
    %c0_i32_1 = arith.constant 0 : i32
    return %c0_i32, %c0_i32_0 : i32, i32
  }
  func.func @transform_4(%arg0: i32) -> (i32, i32) {
    %c0_i32 = arith.constant 0 : i32
    %c0_i32_0 = arith.constant 0 : i32
    %c0_i32_1 = arith.constant 0 : i32
    return %c0_i32, %c0_i32_0 : i32, i32
  }
  func.func @transform_5(%arg0: i32) -> (i32, i32) {
    %c0_i32 = arith.constant 0 : i32
    %c0_i32_0 = arith.constant 0 : i32
    %c0_i32_1 = arith.constant 0 : i32
    return %c0_i32, %c0_i32_0 : i32, i32
  }
  func.func @transform_6(%arg0: i32) -> (i32, i32) {
    %c0_i32 = arith.constant 0 : i32
    %c0_i32_0 = arith.constant 0 : i32
    %c0_i32_1 = arith.constant 0 : i32
    return %c0_i32, %c0_i32_0 : i32, i32
  }
  func.func @transform_7(%arg0: i32) -> (i32, i32) {
    %c0_i32 = arith.constant 0 : i32
    %c0_i32_0 = arith.constant 0 : i32
    return %arg0, %c0_i32 : i32, i32
  }
}

</mosaic_0001>

<llo_original>
// kernel: tpu_custom_call.1
$region0: #{tpu_custom_call.1}
  #allocation0 [shape = 'u32[]', space=smem, size = 0x4, offset = 0x4, fixed_abs, tag = 'smem constant byte address 0x4 - core index']
  #allocation1 [shape = 'u32[144,128]{1,0:T(1,128)}', space=vmem, size = 0x12000, scoped, tag = 'internal scratch']
  %s0 = inlined_call_operand.hbm [shape: bf16[16,32], index: 0, kind: input, shape index: {}]
  %s1 = inlined_call_operand.hbm [shape: bf16[32,384], index: 1, kind: input, shape index: {}]
  %s2 = inlined_call_operand.vmem [shape: f32[1,384], index: 2, kind: input, shape index: {}]
  %s3 = inlined_call_operand.hbm [shape: bf16[384,128], index: 3, kind: input, shape index: {}]
  %s4 = inlined_call_operand.vmem [shape: f32[1,128], index: 4, kind: input, shape index: {}]
  %s5 = inlined_call_operand.hbm [shape: bf16[128,128], index: 5, kind: input, shape index: {}]
  %s6 = inlined_call_operand.vmem [shape: f32[1,128], index: 6, kind: input, shape index: {}]
  %s7 = inlined_call_operand.hbm [shape: bf16[16,128], index: 7, kind: output, shape index: {}]
  %s8 = sld [smem:[#allocation0]]
  $region54: #{tpu_custom_call.1} parent=0
    _
  %s10 = ssub.s32 1, %s8
  %s11 = scalar_select 0, %s10, %s8
  $region1: #{tpu_custom_call.1} parent=0
    #allocation2 [shape = 'u8[4096]{0}', space=vmem, size = 0x1000, scoped, tag = 'input window, operand 0, single buffered']
    #allocation3 [shape = 's32[1]{0}', space=sflag, size = 0x4, scoped, tag = 'scoped memory for tpu_custom_call.1']
    #allocation4 [shape = 's32[1]{0}', space=sflag, size = 0x4, scoped, tag = 'scoped memory for tpu_custom_call.1']
    #allocation5 [shape = 'u8[24576]{0}', space=vmem, size = 0x6000, scoped, tag = 'input window, operand 1, single buffered']
    #allocation6 [shape = 's32[1]{0}', space=sflag, size = 0x4, scoped, tag = 'scoped memory for tpu_custom_call.1']
    #allocation7 [shape = 'u8[98304]{0}', space=vmem, size = 0x18000, scoped, tag = 'input window, operand 3, single buffered']
    #allocation8 [shape = 'u8[32768]{0}', space=vmem, size = 0x8000, scoped, tag = 'input window, operand 5, single buffered']
    #allocation9 [shape = 's32[1]{0}', space=sflag, size = 0x4, scoped, tag = 'scoped memory for tpu_custom_call.1']
    #allocation10 [shape = 'u8[4096]{0}', space=vmem, size = 0x1000, scoped, tag = 'output window, operand 0, single buffered']
    %12 = vsyncpa [#allocation3], 0
    %13 = vsyncpa [#allocation6], 0
    %14 = vsyncpa [#allocation9], 0
    %15 = vsyncpa [#allocation4], 0
    // Predicated region
    $region2: #{tpu_custom_call.1} parent=1 // pred_check
      _
    $region3: #{tpu_custom_call.1} parent=1 // pred_check_branch
      %17 = sbr.rel (0) target = $region5
    $region4: #{tpu_custom_call.1} parent=1 // pred_region
      %s19 = ssub.s32 128, 128
      %20 = vsyncadd [#allocation3], %s19
      %s21 = sshll.u32 [#allocation2], 4
      %s22 = int_to_ptr.vmem [resolvable:$true] %s21
      %27 = dma.hbm_to_vmem [thread:$0]  %s0, 128, %s22, [#allocation3], 64, 64, 4
    $region5: #{tpu_custom_call.1} parent=1 // pred_fallthru
      _
    // Predicated region
    $region6: #{tpu_custom_call.1} parent=1 // pred_check
      _
    $region7: #{tpu_custom_call.1} parent=1 // pred_check_branch
      %29 = sbr.rel (0) target = $region9
    $region8: #{tpu_custom_call.1} parent=1 // pred_region
      %s31 = ssub.s32 768, 768
      %32 = vsyncadd [#allocation6], %s31
      %s33 = sshll.u32 [#allocation5], 4
      %s34 = int_to_ptr.vmem [resolvable:$true] %s33
      %39 = dma.hbm_to_vmem [thread:$0]  %s1, 768, %s34, [#allocation6], 192, 192, 12
    $region9: #{tpu_custom_call.1} parent=1 // pred_fallthru
      _
    // Predicated region
    $region10: #{tpu_custom_call.1} parent=1 // pred_check
      _
    $region11: #{tpu_custom_call.1} parent=1 // pred_check_branch
      %41 = sbr.rel (0) target = $region13
    $region12: #{tpu_custom_call.1} parent=1 // pred_region
      _
    $region13: #{tpu_custom_call.1} parent=1 // pred_fallthru
      _
    // Predicated region
    $region14: #{tpu_custom_call.1} parent=1 // pred_check
      _
    $region15: #{tpu_custom_call.1} parent=1 // pred_check_branch
      %43 = sbr.rel (0) target = $region17
    $region16: #{tpu_custom_call.1} parent=1 // pred_region
      %s45 = ssub.s32 3072, 3072
      %46 = vsyncadd [#allocation6], %s45
      %s47 = sshll.u32 [#allocation7], 4
      %s48 = int_to_ptr.vmem [resolvable:$true] %s47
      %53 = dma.hbm_to_vmem [thread:$0]  %s3, 3072, %s48, [#allocation6], 64, 64, 4
    $region17: #{tpu_custom_call.1} parent=1 // pred_fallthru
      _
    // Predicated region
    $region18: #{tpu_custom_call.1} parent=1 // pred_check
      _
    $region19: #{tpu_custom_call.1} parent=1 // pred_check_branch
      %55 = sbr.rel (0) target = $region21
    $region20: #{tpu_custom_call.1} parent=1 // pred_region
      _
    $region21: #{tpu_custom_call.1} parent=1 // pred_fallthru
      _
    // Predicated region
    $region22: #{tpu_custom_call.1} parent=1 // pred_check
      _
    $region23: #{tpu_custom_call.1} parent=1 // pred_check_branch
      %57 = sbr.rel (0) target = $region25
    $region24: #{tpu_custom_call.1} parent=1 // pred_region
      %s59 = ssub.s32 1024, 1024
      %60 = vsyncadd [#allocation9], %s59
      %s61 = sshll.u32 [#allocation8], 4
      %s62 = int_to_ptr.vmem [resolvable:$true] %s61
      %67 = dma.hbm_to_vmem [thread:$0]  %s5, 1024, %s62, [#allocation9], 64, 64, 4
    $region25: #{tpu_custom_call.1} parent=1 // pred_fallthru
      _
    // Predicated region
    $region26: #{tpu_custom_call.1} parent=1 // pred_check
      _
    $region27: #{tpu_custom_call.1} parent=1 // pred_check_branch
      %69 = sbr.rel (0) target = $region29
    $region28: #{tpu_custom_call.1} parent=1 // pred_region
      _
    $region29: #{tpu_custom_call.1} parent=1 // pred_fallthru
      _
    // Predicated region
    $region30: #{tpu_custom_call.1} parent=1 // pred_check
      _
    $region31: #{tpu_custom_call.1} parent=1 // pred_check_branch
      %71 = sbr.rel (0) target = $region33
    $region32: #{tpu_custom_call.1} parent=1 // pred_region
      %72 = dma.done [#allocation3], 128
    $region33: #{tpu_custom_call.1} parent=1 // pred_fallthru
      _
    // Predicated region
    $region34: #{tpu_custom_call.1} parent=1 // pred_check
      _
    $region35: #{tpu_custom_call.1} parent=1 // pred_check_branch
      %74 = sbr.rel (0) target = $region37
    $region36: #{tpu_custom_call.1} parent=1 // pred_region
      %75 = dma.done [#allocation6], 768
    $region37: #{tpu_custom_call.1} parent=1 // pred_fallthru
      _
    // Predicated region
    $region38: #{tpu_custom_call.1} parent=1 // pred_check
      _
    $region39: #{tpu_custom_call.1} parent=1 // pred_check_branch
      %77 = sbr.rel (0) target = $region41
    $region40: #{tpu_custom_call.1} parent=1 // pred_region
      %78 = dma.done [#allocation6], 3072
    $region41: #{tpu_custom_call.1} parent=1 // pred_fallthru
      _
    // Predicated region
    $region42: #{tpu_custom_call.1} parent=1 // pred_check
      _
    $region43: #{tpu_custom_call.1} parent=1 // pred_check_branch
      %80 = sbr.rel (0) target = $region45
    $region44: #{tpu_custom_call.1} parent=1 // pred_region
      %81 = dma.done [#allocation9], 1024
    $region45: #{tpu_custom_call.1} parent=1 // pred_fallthru
      _
    %v83 = vld [vmem:[#allocation2] sm:$0xf]
    %v84 = vld [vmem:[#allocation2 + $0x4] sm:$0xf]
    %v85 = vld [vmem:[#allocation5] sm:$0xff]
    %v86 = vld [vmem:[#allocation5 + $0x8] sm:$0xf]
    %v87 = vld [vmem:[#allocation5 + $0xc] sm:$0xff]
    %v88 = vld [vmem:[#allocation5 + $0x14] sm:$0xf]
    %v89 = vld [vmem:[#allocation5 + $0x18] sm:$0xff]
    %v90 = vld [vmem:[#allocation5 + $0x20] sm:$0xf]
    %v91 = vld [vmem:[#allocation5 + $0x24] sm:$0xff]
    %v92 = vld [vmem:[#allocation5 + $0x2c] sm:$0xf]
    %v93 = vld [vmem:[%s2] sm:$0x7]
    %v95 = vlaneseq
    %v96 = vshrl.u32 %v95, 7
    %v97 = vsub.s32 0, %v96
    %v98 = vrot.slane %v93, %v97
    %v99 = vlaneseq
    %v100 = vshrl.u32 %v99, 7
    %v101 = vsub.s32 1, %v100
    %v102 = vrot.slane %v93, %v101
    %v103 = vlaneseq
    %v104 = vshrl.u32 %v103, 7
    %v105 = vsub.s32 2, %v104
    %v106 = vrot.slane %v93, %v105
    %v112 = vunpack.c.l.b16 %v83
    %v113 = vunpack.c.l.b16 %v84
    %v114 = vpack.c.b16 %v113, %v112
    %v123 = vunpack.c.l.b16 %v85
    %v124 = vunpack.c.h.b16 %v85
    %v125 = vunpack.c.l.b16 %v86
    %v126 = vunpack.c.l.b16 %v87
    %v127 = vunpack.c.h.b16 %v87
    %v128 = vunpack.c.l.b16 %v88
    %v129 = vunpack.c.l.b16 %v89
    %v130 = vunpack.c.h.b16 %v89
    %v131 = vunpack.c.l.b16 %v90
    %v132 = vunpack.c.l.b16 %v91
    %v133 = vunpack.c.h.b16 %v91
    %v134 = vunpack.c.l.b16 %v92
    %v135 = vpack.c.b16 %v126, %v123
    %v136 = vpack.c.b16 %v127, %v124
    %v137 = vpack.c.b16 %v128, %v125
    %v138 = vpack.c.b16 %v132, %v129
    %v139 = vpack.c.b16 %v133, %v130
    %v140 = vpack.c.b16 %v134, %v131
    %vm147 = vcmask 261120
    %v149 = vsel %vm147, %v114, 0
    %151 = vmatprep.subr.bf16.mxu0 0
    %152 = vmatpush1.bf16.msra.mxu0 0
    %153 = vmatprep.subr.bf16.mxu0 0
    %154 = vmatpush1.bf16.msra.mxu0 0
    %155 = vmatprep.subr.bf16.mxu0 0
    %156 = vmatpush1.bf16.msra.mxu0 0
    %157 = vmatprep.subr.bf16.mxu0 0
    %158 = vmatpush1.bf16.msra.mxu0 0
    %159 = vmatprep.subr.bf16.mxu0 0
    %160 = vmatpush1.bf16.msra.mxu0 0
    %161 = vmatprep.subr.bf16.mxu0 0
    %162 = vmatpush1.bf16.msra.mxu0 0
    %163 = vmatprep.subr.bf16.mxu0 %v139
    %164 = vmatpush1.bf16.msra.mxu0 %v138
    %165 = vmatprep.subr.bf16.mxu0 %v136
    %166 = vmatpush1.bf16.msra.mxu0 %v135
    %167 = vmatprep.subr.bf16.mxu0 0
    %168 = vmatpush2.bf16.msra.mxu0 0
    %169 = vmatprep.subr.bf16.mxu0 0
    %170 = vmatpush2.bf16.msra.mxu0 0
    %171 = vmatprep.subr.bf16.mxu0 0
    %172 = vmatpush2.bf16.msra.mxu0 0
    %173 = vmatprep.subr.bf16.mxu0 0
    %174 = vmatpush2.bf16.msra.mxu0 0
    %175 = vmatprep.subr.bf16.mxu0 0
    %176 = vmatpush2.bf16.msra.mxu0 0
    %177 = vmatprep.subr.bf16.mxu0 0
    %178 = vmatpush2.bf16.msra.mxu0 0
    %179 = vmatprep.subr.bf16.mxu0 0
    %180 = vmatpush2.bf16.msra.mxu0 0
    %181 = vmatprep.subr.bf16.mxu0 0
    %182 = vmatpush2.bf16.msra.mxu0 0
    %183 = vmatprep.mubr.bf16.mxu0 0
    %184 = vmatmul.mubr.bf16.gmra.mxu0 %v149
    %v185 = vpop.f32.mrf.mxu0
    %v186 = vadd.f32 %v98, %v185
    %v187 = vpop.f32.mrf.mxu0
    %v188 = vadd.f32 %v102, %v187
    %v189 = vpop.f32.mrf.mxu0
    %v190 = vadd.f32 %v98, %v189
    %v191 = vpop.f32.mrf.mxu0
    %v192 = vadd.f32 %v102, %v191
    %193 = vdwg.mxu0
    %194 = vmatprep.subr.bf16.mxu0 0
    %195 = vmatpush1.bf16.msra.mxu0 0
    %196 = vmatprep.subr.bf16.mxu0 0
    %197 = vmatpush1.bf16.msra.mxu0 0
    %198 = vmatprep.subr.bf16.mxu0 0
    %199 = vmatpush1.bf16.msra.mxu0 0
    %200 = vmatprep.subr.bf16.mxu0 0
    %201 = vmatpush1.bf16.msra.mxu0 0
    %202 = vmatprep.subr.bf16.mxu0 0
    %203 = vmatpush1.bf16.msra.mxu0 0
    %204 = vmatprep.subr.bf16.mxu0 0
    %205 = vmatpush1.bf16.msra.mxu0 0
    %206 = vmatprep.subr.bf16.mxu0 0
    %207 = vmatpush1.bf16.msra.mxu0 %v140
    %208 = vmatprep.subr.bf16.mxu0 0
    %209 = vmatpush1.bf16.msra.mxu0 %v137
    %210 = vmatprep.subr.bf16.mxu0 0
    %211 = vmatpush2.bf16.msra.mxu0 0
    %212 = vmatprep.subr.bf16.mxu0 0
    %213 = vmatpush2.bf16.msra.mxu0 0
    %214 = vmatprep.subr.bf16.mxu0 0
    %215 = vmatpush2.bf16.msra.mxu0 0
    %216 = vmatprep.subr.bf16.mxu0 0
    %217 = vmatpush2.bf16.msra.mxu0 0
    %218 = vmatprep.subr.bf16.mxu0 0
    %219 = vmatpush2.bf16.msra.mxu0 0
    %220 = vmatprep.subr.bf16.mxu0 0
    %221 = vmatpush2.bf16.msra.mxu0 0
    %222 = vmatprep.subr.bf16.mxu0 0
    %223 = vmatpush2.bf16.msra.mxu0 0
    %224 = vmatprep.subr.bf16.mxu0 0
    %225 = vmatpush2.bf16.msra.mxu0 0
    %226 = vmatprep.mubr.bf16.mxu0 0
    %227 = vmatmul.mubr.bf16.gmra.mxu0 %v149
    %v228 = vpop.f32.mrf.mxu0
    %v229 = vadd.f32 %v106, %v228
    %v230 = vpop.f32.mrf.mxu0
    %v231 = vpop.f32.mrf.mxu0
    %v232 = vadd.f32 %v106, %v231
    %v233 = vpop.f32.mrf.mxu0
    %234 = vdwg.mxu0
    %v235 = vmax.f32 %v186, 0.0
    %v236 = vmax.f32 %v188, 0.0
    %v237 = vmax.f32 %v229, 0.0
    %v238 = vmax.f32 %v190, 0.0
    %v239 = vmax.f32 %v192, 0.0
    %v240 = vmax.f32 %v232, 0.0
    %v241 = vpack.c.bf16 %v238, %v235
    %v242 = vpack.c.bf16 %v239, %v236
    %v243 = vpack.c.bf16 %v240, %v237
    %v244 = vld [vmem:[#allocation7] sm:$0xf]
    %v245 = vld [vmem:[#allocation7 + $0x4] sm:$0xf]
    %v246 = vld [vmem:[#allocation7 + $0x8] sm:$0xf]
    %v247 = vld [vmem:[#allocation7 + $0xc] sm:$0xf]
    %v248 = vld [vmem:[#allocation7 + $0x10] sm:$0xf]
    %v249 = vld [vmem:[#allocation7 + $0x14] sm:$0xf]
    %v250 = vld [vmem:[#allocation7 + $0x18] sm:$0xf]
    %v251 = vld [vmem:[#allocation7 + $0x1c] sm:$0xf]
    %v252 = vld [vmem:[#allocation7 + $0x20] sm:$0xf]
    %v253 = vld [vmem:[#allocation7 + $0x24] sm:$0xf]
    %v254 = vld [vmem:[#allocation7 + $0x28] sm:$0xf]
    %v255 = vld [vmem:[#allocation7 + $0x2c] sm:$0xf]
    %v256 = vld [vmem:[#allocation7 + $0x30] sm:$0xf]
    %v257 = vld [vmem:[#allocation7 + $0x34] sm:$0xf]
    %v258 = vld [vmem:[#allocation7 + $0x38] sm:$0xf]
    %v259 = vld [vmem:[#allocation7 + $0x3c] sm:$0xf]
    %v260 = vld [vmem:[#allocation7 + $0x40] sm:$0xf]
    %v261 = vld [vmem:[#allocation7 + $0x44] sm:$0xf]
    %v262 = vld [vmem:[#allocation7 + $0x48] sm:$0xf]
    %v263 = vld [vmem:[#allocation7 + $0x4c] sm:$0xf]
    %v264 = vld [vmem:[#allocation7 + $0x50] sm:$0xf]
    %v265 = vld [vmem:[#allocation7 + $0x54] sm:$0xf]
    %v266 = vld [vmem:[#allocation7 + $0x58] sm:$0xf]
    %v267 = vld [vmem:[#allocation7 + $0x5c] sm:$0xf]
    %v268 = vld [vmem:[#allocation7 + $0x60] sm:$0xf]
    %v269 = vld [vmem:[#allocation7 + $0x64] sm:$0xf]
    %v270 = vld [vmem:[#allocation7 + $0x68] sm:$0xf]
    %v271 = vld [vmem:[#allocation7 + $0x6c] sm:$0xf]
    %v272 = vld [vmem:[#allocation7 + $0x70] sm:$0xf]
    %v273 = vld [vmem:[#allocation7 + $0x74] sm:$0xf]
    %v274 = vld [vmem:[#allocation7 + $0x78] sm:$0xf]
    %v275 = vld [vmem:[#allocation7 + $0x7c] sm:$0xf]
    %v276 = vld [vmem:[#allocation7 + $0x80] sm:$0xf]
    %v277 = vld [vmem:[#allocation7 + $0x84] sm:$0xf]
    %v278 = vld [vmem:[#allocation7 + $0x88] sm:$0xf]
    %v279 = vld [vmem:[#allocation7 + $0x8c] sm:$0xf]
    %v280 = vld [vmem:[#allocation7 + $0x90] sm:$0xf]
    %v281 = vld [vmem:[#allocation7 + $0x94] sm:$0xf]
    %v282 = vld [vmem:[#allocation7 + $0x98] sm:$0xf]
    %v283 = vld [vmem:[#allocation7 + $0x9c] sm:$0xf]
    %v284 = vld [vmem:[#allocation7 + $0xa0] sm:$0xf]
    %v285 = vld [vmem:[#allocation7 + $0xa4] sm:$0xf]
    %v286 = vld [vmem:[#allocation7 + $0xa8] sm:$0xf]
    %v287 = vld [vmem:[#allocation7 + $0xac] sm:$0xf]
    %v288 = vld [vmem:[#allocation7 + $0xb0] sm:$0xf]
    %v289 = vld [vmem:[#allocation7 + $0xb4] sm:$0xf]
    %v290 = vld [vmem:[#allocation7 + $0xb8] sm:$0xf]
    %v291 = vld [vmem:[#allocation7 + $0xbc] sm:$0xf]
    %v292 = vld [vmem:[%s4] sm:$0x1]
    %v294 = vlaneseq
    %v295 = vshrl.u32 %v294, 7
    %v296 = vsub.s32 0, %v295
    %v297 = vrot.slane %v292, %v296
    %v347 = vunpack.c.l.b16 %v244
    %v348 = vunpack.c.l.b16 %v245
    %v349 = vunpack.c.l.b16 %v246
    %v350 = vunpack.c.l.b16 %v247
    %v351 = vunpack.c.l.b16 %v248
    %v352 = vunpack.c.l.b16 %v249
    %v353 = vunpack.c.l.b16 %v250
    %v354 = vunpack.c.l.b16 %v251
    %v355 = vunpack.c.l.b16 %v252
    %v356 = vunpack.c.l.b16 %v253
    %v357 = vunpack.c.l.b16 %v254
    %v358 = vunpack.c.l.b16 %v255
    %v359 = vunpack.c.l.b16 %v256
    %v360 = vunpack.c.l.b16 %v257
    %v361 = vunpack.c.l.b16 %v258
    %v362 = vunpack.c.l.b16 %v259
    %v363 = vunpack.c.l.b16 %v260
    %v364 = vunpack.c.l.b16 %v261
    %v365 = vunpack.c.l.b16 %v262
    %v366 = vunpack.c.l.b16 %v263
    %v367 = vunpack.c.l.b16 %v264
    %v368 = vunpack.c.l.b16 %v265
    %v369 = vunpack.c.l.b16 %v266
    %v370 = vunpack.c.l.b16 %v267
    %v371 = vunpack.c.l.b16 %v268
    %v372 = vunpack.c.l.b16 %v269
    %v373 = vunpack.c.l.b16 %v270
    %v374 = vunpack.c.l.b16 %v271
    %v375 = vunpack.c.l.b16 %v272
    %v376 = vunpack.c.l.b16 %v273
    %v377 = vunpack.c.l.b16 %v274
    %v378 = vunpack.c.l.b16 %v275
    %v379 = vunpack.c.l.b16 %v276
    %v380 = vunpack.c.l.b16 %v277
    %v381 = vunpack.c.l.b16 %v278
    %v382 = vunpack.c.l.b16 %v279
    %v383 = vunpack.c.l.b16 %v280
    %v384 = vunpack.c.l.b16 %v281
    %v385 = vunpack.c.l.b16 %v282
    %v386 = vunpack.c.l.b16 %v283
    %v387 = vunpack.c.l.b16 %v284
    %v388 = vunpack.c.l.b16 %v285
    %v389 = vunpack.c.l.b16 %v286
    %v390 = vunpack.c.l.b16 %v287
    %v391 = vunpack.c.l.b16 %v288
    %v392 = vunpack.c.l.b16 %v289
    %v393 = vunpack.c.l.b16 %v290
    %v394 = vunpack.c.l.b16 %v291
    %v395 = vpack.c.b16 %v348, %v347
    %v396 = vpack.c.b16 %v350, %v349
    %v397 = vpack.c.b16 %v352, %v351
    %v398 = vpack.c.b16 %v354, %v353
    %v399 = vpack.c.b16 %v356, %v355
    %v400 = vpack.c.b16 %v358, %v357
    %v401 = vpack.c.b16 %v360, %v359
    %v402 = vpack.c.b16 %v362, %v361
    %v403 = vpack.c.b16 %v364, %v363
    %v404 = vpack.c.b16 %v366, %v365
    %v405 = vpack.c.b16 %v368, %v367
    %v406 = vpack.c.b16 %v370, %v369
    %v407 = vpack.c.b16 %v372, %v371
    %v408 = vpack.c.b16 %v374, %v373
    %v409 = vpack.c.b16 %v376, %v375
    %v410 = vpack.c.b16 %v378, %v377
    %v411 = vpack.c.b16 %v380, %v379
    %v412 = vpack.c.b16 %v382, %v381
    %v413 = vpack.c.b16 %v384, %v383
    %v414 = vpack.c.b16 %v386, %v385
    %v415 = vpack.c.b16 %v388, %v387
    %v416 = vpack.c.b16 %v390, %v389
    %v417 = vpack.c.b16 %v392, %v391
    %v418 = vpack.c.b16 %v394, %v393
    %443 = vmatprep.subr.bf16.mxu0 0
    %444 = vmatpush1.bf16.msra.mxu0 %v402
    %445 = vmatprep.subr.bf16.mxu0 0
    %446 = vmatpush1.bf16.msra.mxu0 %v401
    %447 = vmatprep.subr.bf16.mxu0 0
    %448 = vmatpush1.bf16.msra.mxu0 %v400
    %449 = vmatprep.subr.bf16.mxu0 0
    %450 = vmatpush1.bf16.msra.mxu0 %v399
    %451 = vmatprep.subr.bf16.mxu0 0
    %452 = vmatpush1.bf16.msra.mxu0 %v398
    %453 = vmatprep.subr.bf16.mxu0 0
    %454 = vmatpush1.bf16.msra.mxu0 %v397
    %455 = vmatprep.subr.bf16.mxu0 0
    %456 = vmatpush1.bf16.msra.mxu0 %v396
    %457 = vmatprep.subr.bf16.mxu0 0
    %458 = vmatpush1.bf16.msra.mxu0 %v395
    %459 = vmatprep.subr.bf16.mxu0 0
    %460 = vmatpush2.bf16.msra.mxu0 %v410
    %461 = vmatprep.subr.bf16.mxu0 0
    %462 = vmatpush2.bf16.msra.mxu0 %v409
    %463 = vmatprep.subr.bf16.mxu0 0
    %464 = vmatpush2.bf16.msra.mxu0 %v408
    %465 = vmatprep.subr.bf16.mxu0 0
    %466 = vmatpush2.bf16.msra.mxu0 %v407
    %467 = vmatprep.subr.bf16.mxu0 0
    %468 = vmatpush2.bf16.msra.mxu0 %v406
    %469 = vmatprep.subr.bf16.mxu0 0
    %470 = vmatpush2.bf16.msra.mxu0 %v405
    %471 = vmatprep.subr.bf16.mxu0 0
    %472 = vmatpush2.bf16.msra.mxu0 %v404
    %473 = vmatprep.subr.bf16.mxu0 0
    %474 = vmatpush2.bf16.msra.mxu0 %v403
    %475 = vmatprep.mubr.bf16.mxu0 %v242
    %476 = vmatmul.mubr.bf16.gmra.mxu0 %v241
    %v477 = vpop.f32.mrf.mxu0
    %v478 = vadd.f32 %v297, %v477
    %v479 = vpop.f32.mrf.mxu0
    %v480 = vpop.f32.mrf.mxu0
    %v481 = vadd.f32 %v297, %v480
    %v482 = vpop.f32.mrf.mxu0
    %483 = vdwg.mxu0
    %484 = vmatprep.subr.bf16.mxu0 0
    %485 = vmatpush1.bf16.msra.mxu0 %v418
    %486 = vmatprep.subr.bf16.mxu0 0
    %487 = vmatpush1.bf16.msra.mxu0 %v417
    %488 = vmatprep.subr.bf16.mxu0 0
    %489 = vmatpush1.bf16.msra.mxu0 %v416
    %490 = vmatprep.subr.bf16.mxu0 0
    %491 = vmatpush1.bf16.msra.mxu0 %v415
    %492 = vmatprep.subr.bf16.mxu0 0
    %493 = vmatpush1.bf16.msra.mxu0 %v414
    %494 = vmatprep.subr.bf16.mxu0 0
    %495 = vmatpush1.bf16.msra.mxu0 %v413
    %496 = vmatprep.subr.bf16.mxu0 0
    %497 = vmatpush1.bf16.msra.mxu0 %v412
    %498 = vmatprep.subr.bf16.mxu0 0
    %499 = vmatpush1.bf16.msra.mxu0 %v411
    %500 = vmatprep.subr.bf16.mxu0 0
    %501 = vmatpush2.bf16.msra.mxu0 0
    %502 = vmatprep.subr.bf16.mxu0 0
    %503 = vmatpush2.bf16.msra.mxu0 0
    %504 = vmatprep.subr.bf16.mxu0 0
    %505 = vmatpush2.bf16.msra.mxu0 0
    %506 = vmatprep.subr.bf16.mxu0 0
    %507 = vmatpush2.bf16.msra.mxu0 0
    %508 = vmatprep.subr.bf16.mxu0 0
    %509 = vmatpush2.bf16.msra.mxu0 0
    %510 = vmatprep.subr.bf16.mxu0 0
    %511 = vmatpush2.bf16.msra.mxu0 0
    %512 = vmatprep.subr.bf16.mxu0 0
    %513 = vmatpush2.bf16.msra.mxu0 0
    %514 = vmatprep.subr.bf16.mxu0 0
    %515 = vmatpush2.bf16.msra.mxu0 0
    %516 = vmatprep.mubr.bf16.mxu0 0
    %517 = vmatmul.mubr.bf16.gmra.mxu0 %v243
    %v518 = vpop.f32.mrf.mxu0
    %v519 = vadd.f32 %v478, %v518
    %v520 = vpop.f32.mrf.mxu0
    %v521 = vpop.f32.mrf.mxu0
    %v522 = vadd.f32 %v481, %v521
    %v523 = vpop.f32.mrf.mxu0
    %524 = vdwg.mxu0
    %v525 = vmax.f32 %v519, 0.0
    %v526 = vmax.f32 %v522, 0.0
    %v527 = vpack.c.bf16 %v526, %v525
    %v528 = vld [vmem:[#allocation8] sm:$0xf]
    %v529 = vld [vmem:[#allocation8 + $0x4] sm:$0xf]
    %v530 = vld [vmem:[#allocation8 + $0x8] sm:$0xf]
    %v531 = vld [vmem:[#allocation8 + $0xc] sm:$0xf]
    %v532 = vld [vmem:[#allocation8 + $0x10] sm:$0xf]
    %v533 = vld [vmem:[#allocation8 + $0x14] sm:$0xf]
    %v534 = vld [vmem:[#allocation8 + $0x18] sm:$0xf]
    %v535 = vld [vmem:[#allocation8 + $0x1c] sm:$0xf]
    %v536 = vld [vmem:[#allocation8 + $0x20] sm:$0xf]
    %v537 = vld [vmem:[#allocation8 + $0x24] sm:$0xf]
    %v538 = vld [vmem:[#allocation8 + $0x28] sm:$0xf]
    %v539 = vld [vmem:[#allocation8 + $0x2c] sm:$0xf]
    %v540 = vld [vmem:[#allocation8 + $0x30] sm:$0xf]
    %v541 = vld [vmem:[#allocation8 + $0x34] sm:$0xf]
    %v542 = vld [vmem:[#allocation8 + $0x38] sm:$0xf]
    %v543 = vld [vmem:[#allocation8 + $0x3c] sm:$0xf]
    %v544 = vld [vmem:[%s6] sm:$0x1]
    %v546 = vlaneseq
    %v547 = vshrl.u32 %v546, 7
    %v548 = vsub.s32 0, %v547
    %v549 = vrot.slane %v544, %v548
    %v567 = vunpack.c.l.b16 %v528
    %v568 = vunpack.c.l.b16 %v529
    %v569 = vunpack.c.l.b16 %v530
    %v570 = vunpack.c.l.b16 %v531
    %v571 = vunpack.c.l.b16 %v532
    %v572 = vunpack.c.l.b16 %v533
    %v573 = vunpack.c.l.b16 %v534
    %v574 = vunpack.c.l.b16 %v535
    %v575 = vunpack.c.l.b16 %v536
    %v576 = vunpack.c.l.b16 %v537
    %v577 = vunpack.c.l.b16 %v538
    %v578 = vunpack.c.l.b16 %v539
    %v579 = vunpack.c.l.b16 %v540
    %v580 = vunpack.c.l.b16 %v541
    %v581 = vunpack.c.l.b16 %v542
    %v582 = vunpack.c.l.b16 %v543
    %v583 = vpack.c.b16 %v568, %v567
    %v584 = vpack.c.b16 %v570, %v569
    %v585 = vpack.c.b16 %v572, %v571
    %v586 = vpack.c.b16 %v574, %v573
    %v587 = vpack.c.b16 %v576, %v575
    %v588 = vpack.c.b16 %v578, %v577
    %v589 = vpack.c.b16 %v580, %v579
    %v590 = vpack.c.b16 %v582, %v581
    %599 = vmatprep.subr.bf16.mxu0 0
    %600 = vmatpush1.bf16.msra.mxu0 %v590
    %601 = vmatprep.subr.bf16.mxu0 0
    %602 = vmatpush1.bf16.msra.mxu0 %v589
    %603 = vmatprep.subr.bf16.mxu0 0
    %604 = vmatpush1.bf16.msra.mxu0 %v588
    %605 = vmatprep.subr.bf16.mxu0 0
    %606 = vmatpush1.bf16.msra.mxu0 %v587
    %607 = vmatprep.subr.bf16.mxu0 0
    %608 = vmatpush1.bf16.msra.mxu0 %v586
    %609 = vmatprep.subr.bf16.mxu0 0
    %610 = vmatpush1.bf16.msra.mxu0 %v585
    %611 = vmatprep.subr.bf16.mxu0 0
    %612 = vmatpush1.bf16.msra.mxu0 %v584
    %613 = vmatprep.subr.bf16.mxu0 0
    %614 = vmatpush1.bf16.msra.mxu0 %v583
    %615 = vmatprep.subr.bf16.mxu0 0
    %616 = vmatpush2.bf16.msra.mxu0 0
    %617 = vmatprep.subr.bf16.mxu0 0
    %618 = vmatpush2.bf16.msra.mxu0 0
    %619 = vmatprep.subr.bf16.mxu0 0
    %620 = vmatpush2.bf16.msra.mxu0 0
    %621 = vmatprep.subr.bf16.mxu0 0
    %622 = vmatpush2.bf16.msra.mxu0 0
    %623 = vmatprep.subr.bf16.mxu0 0
    %624 = vmatpush2.bf16.msra.mxu0 0
    %625 = vmatprep.subr.bf16.mxu0 0
    %626 = vmatpush2.bf16.msra.mxu0 0
    %627 = vmatprep.subr.bf16.mxu0 0
    %628 = vmatpush2.bf16.msra.mxu0 0
    %629 = vmatprep.subr.bf16.mxu0 0
    %630 = vmatpush2.bf16.msra.mxu0 0
    %631 = vmatprep.mubr.bf16.mxu0 0
    %632 = vmatmul.mubr.bf16.gmra.mxu0 %v527
    %v633 = vpop.f32.mrf.mxu0
    %v634 = vadd.f32 %v549, %v633
    %v635 = vpop.f32.mrf.mxu0
    %v636 = vpop.f32.mrf.mxu0
    %v637 = vadd.f32 %v549, %v636
    %v638 = vpop.f32.mrf.mxu0
    %639 = vdwg.mxu0
    %v640 = vpack.c.bf16 %v637, %v634
    %v642 = vunpack.c.l.b16 %v640
    %v643 = vunpack.c.h.b16 %v640
    %v644 = vpack.c.b16 %v642, %v642
    %v645 = vpack.c.b16 %v643, %v643
    %648 = vst [vmem:[#allocation10] sm:$0xf] %v644
    %649 = vst [vmem:[#allocation10 + $0x4] sm:$0xf] %v645
    // Predicated region
    $region46: #{tpu_custom_call.1} parent=1 // pred_check
      _
    $region47: #{tpu_custom_call.1} parent=1 // pred_check_branch
      %651 = sbr.rel (0) target = $region49
    $region48: #{tpu_custom_call.1} parent=1 // pred_region
      %s653 = ssub.s32 128, 128
      %654 = vsyncadd [#allocation4], %s653
      %s655 = sshll.u32 [#allocation10], 4
      %s656 = int_to_ptr.vmem [resolvable:$true] %s655
      %661 = dma.vmem_to_hbm [thread:$0]  %s656, 128, %s7, [#allocation4], 64, 64, 4
    $region49: #{tpu_custom_call.1} parent=1 // pred_fallthru
      _
    // Predicated region
    $region50: #{tpu_custom_call.1} parent=1 // pred_check
      _
    $region51: #{tpu_custom_call.1} parent=1 // pred_check_branch
      %663 = sbr.rel (0) target = $region53
    $region52: #{tpu_custom_call.1} parent=1 // pred_region
      %664 = dma.done [#allocation4], 128
    $region53: #{tpu_custom_call.1} parent=1 // pred_fallthru
      _
    %665 = vsyncpa [#allocation3], 1
    %666 = vsyncpa [#allocation6], 1
    %667 = vsyncpa [#allocation9], 1
    %668 = vsyncpa [#allocation4], 1

</llo_original>
